<compile_context>
chip_gen: v6e
topology: v6e:2x2x1
jax: 0.10.0
libtpu: 0.0.40
codegen_flags: <defaults>
</compile_context>

<pallas_src>
import jax
import jax.numpy as jnp
from jax.experimental import pallas as pl
from jax.experimental.pallas import tpu as pltpu


def _round_up(x: int, m: int) -> int:
    return (x + m - 1) // m * m


# ---------------------------------------------------------------------------
# Kernels
# ---------------------------------------------------------------------------
def _linear_bias_kernel(x_ref, w_ref, b_ref, o_ref):
    """o = x @ w + b for one output tile; K fits a single block (no scratch)."""
    acc = jnp.dot(x_ref[...], w_ref[...], preferred_element_type=jnp.float32)
    o_ref[...] = (acc + b_ref[...]).astype(o_ref.dtype)


def _linear_acc_kernel(x_ref, w_ref, b_ref, o_ref, acc_ref):
    """Tiled matmul with an f32 VMEM accumulator over the K grid axis."""
    k = pl.program_id(2)

    @pl.when(k == 0)
    def _init():
        acc_ref[...] = jnp.zeros_like(acc_ref)

    acc_ref[...] += jnp.dot(
        x_ref[...], w_ref[...], preferred_element_type=jnp.float32
    )

    @pl.when(k == pl.num_programs(2) - 1)
    def _finalize():
        # b_ref is (1, tn); broadcasts over the tm sublanes.
        o_ref[...] = (acc_ref[...] + b_ref[...]).astype(o_ref.dtype)


# ---------------------------------------------------------------------------
# One-time parameter packing (do at load time, NOT per forward call).
# ---------------------------------------------------------------------------
def pack_linear_params(weight, bias, *, compute_dtype=None):
    """weight (N, K), bias (N,) -> w_t (K, N) in compute_dtype, b_row (1, N) f32."""
    if compute_dtype is None:
        compute_dtype = weight.dtype
    w_t = jnp.asarray(weight).T.astype(compute_dtype)           # (K, N)
    b_row = jnp.asarray(bias).reshape(1, -1).astype(jnp.float32)  # (1, N)
    return w_t, b_row


# ---------------------------------------------------------------------------
# Forward
# ---------------------------------------------------------------------------
def text_encoder_forward(x, w_t, b_row, *, out_dtype=None,
                         tm=512, tn=512, tk=1024):
    """TextEncoder.forward: y = x @ W^T + b, with W packed as w_t = W^T (K, N)."""
    K, N = w_t.shape
    assert x.shape[-1] == K
    lead = x.shape[:-1]
    if out_dtype is None:
        out_dtype = x.dtype

    x2 = x.reshape(-1, K)
    if x2.dtype != w_t.dtype:
        x2 = x2.astype(w_t.dtype)   # feed the MXU in the packed (e.g. bf16) dtype
    M = x2.shape[0]
    itemsize = jnp.dtype(w_t.dtype).itemsize

    # ---- Fast path: whole problem as a single VMEM-resident block ---------
    # block_shape == full array dims sidesteps the (8,128) rule, so there is
    # no padding, no output slice, no accumulator RMW, no grid overhead.
    # This is the path the module's actual shapes (M = B*S, K,N <= 512) take.
    small_bytes = (M * K + K * N) * itemsize + M * N * 4 + 4 * N
    if M <= 256 and K <= 1024 and N <= 512 and small_bytes <= 4 * 1024 * 1024:
        out = pl.pallas_call(
            _linear_bias_kernel,
            out_shape=jax.ShapeDtypeStruct((M, N), out_dtype),
        )(x2, w_t, b_row)
        return out.reshape(*lead, N)

    # ---- General tiled path ------------------------------------------------
    tm = min(tm, _round_up(M, 8))
    tk = min(tk, _round_up(K, 128))
    tn = min(tn, _round_up(N, 128))
    Mp, Kp, Np = _round_up(M, tm), _round_up(K, tk), _round_up(N, tn)

    # Zero-pad only what actually needs padding (K padding is required for a
    # correct accumulation; padded M rows / N cols are sliced off at the end).
    if (M, K) != (Mp, Kp):
        x2 = jnp.pad(x2, ((0, Mp - M), (0, Kp - K)))
    w_p = w_t if (K, N) == (Kp, Np) else jnp.pad(w_t, ((0, Kp - K), (0, Np - N)))
    b_p = b_row if N == Np else jnp.pad(b_row, ((0, 0), (0, Np - N)))

    k_steps = Kp // tk
    compiler_params = pltpu.CompilerParams(
        dimension_semantics=("parallel", "parallel")
        + (("arbitrary",) if k_steps > 1 else ()),
        vmem_limit_bytes=32 * 1024 * 1024,
    )

    if k_steps == 1:
        # K fits one tile: drop the K grid axis and the scratch accumulator.
        grid_spec = pltpu.PrefetchScalarGridSpec(
            num_scalar_prefetch=0,
            grid=(Mp // tm, Np // tn),
            in_specs=[
                pl.BlockSpec((tm, tk), lambda i, j: (i, 0)),   # x tile
                pl.BlockSpec((tk, tn), lambda i, j: (0, j)),   # W^T tile
                pl.BlockSpec((1, tn), lambda i, j: (0, j)),    # bias tile
            ],
            out_specs=pl.BlockSpec((tm, tn), lambda i, j: (i, j)),
        )
        kernel = _linear_bias_kernel
    else:
        grid_spec = pltpu.PrefetchScalarGridSpec(
            num_scalar_prefetch=0,
            grid=(Mp // tm, Np // tn, k_steps),
            in_specs=[
                pl.BlockSpec((tm, tk), lambda i, j, k: (i, k)),   # x tile
                pl.BlockSpec((tk, tn), lambda i, j, k: (k, j)),   # W^T tile
                pl.BlockSpec((1, tn), lambda i, j, k: (0, j)),    # bias tile
            ],
            out_specs=pl.BlockSpec((tm, tn), lambda i, j, k: (i, j)),
            scratch_shapes=[pltpu.VMEM((tm, tn), jnp.float32)],
        )
        kernel = _linear_acc_kernel

    out = pl.pallas_call(
        kernel,
        out_shape=jax.ShapeDtypeStruct((Mp, Np), out_dtype),
        grid_spec=grid_spec,
        compiler_params=compiler_params,
    )(x2, w_p, b_p)

    return out[:M, :N].reshape(*lead, N)


if __name__ == "__main__":
    key = jax.random.PRNGKey(0)
    k_x, k_w, k_b, k_x2, k_w2, k_b2 = jax.random.split(key, 6)

    # TextEncoder(output_dim=32, input_dim=32): small shapes consistent with
    # the module -> batch=2, seq=8, hidden=32.
    B, S, D_in, D_out = 2, 8, 32, 32
    x = jax.random.normal(k_x, (B, S, D_in), dtype=jnp.float32)
    weight = jax.random.normal(k_w, (D_out, D_in), dtype=jnp.float32) * 0.05
    bias = jax.random.normal(k_b, (D_out,), dtype=jnp.float32) * 0.05

    # Pack params once (as a real deployment would, alongside the checkpoint).
    w_t, b_row = pack_linear_params(weight, bias)            # f32 path
    y = jax.block_until_ready(text_encoder_forward(x, w_t, b_row))
    assert y.shape == (B, S, D_out)
    assert y.dtype == jnp.float32

    y_ref = (
        jnp.einsum("bsk,nk->bsn", x, weight, precision=jax.lax.Precision.HIGHEST)
        + bias
    )
    err = float(jnp.max(jnp.abs(y - y_ref)))
    assert err < 2e-3, err

    # Also exercise the general tiled bf16 MXU path (larger, unaligned shapes:
    # multi-step K accumulation + M/N/K padding).
    M2, K2, N2 = 384, 1536, 640
    x_big = jax.random.normal(k_x2, (M2, K2), dtype=jnp.float32)
    w_big = jax.random.normal(k_w2, (N2, K2), dtype=jnp.float32) * 0.02
    b_big = jax.random.normal(k_b2, (N2,), dtype=jnp.float32) * 0.02
    w_big_t, b_big_row = pack_linear_params(w_big, b_big, compute_dtype=jnp.bfloat16)
    y_big = jax.block_until_ready(
        text_encoder_forward(x_big, w_big_t, b_big_row, out_dtype=jnp.float32)
    )
    y_big_ref = (
        jnp.einsum(
            "mk,kn->mn",
            x_big.astype(jnp.bfloat16).astype(jnp.float32),
            w_big_t.astype(jnp.float32),
            precision=jax.lax.Precision.HIGHEST,
        )
        + b_big
    )
    err2 = float(jnp.max(jnp.abs(y_big - y_big_ref)))
    assert err2 < 2e-2, err2

    print("KERNEL_OK")
</pallas_src>

<mosaic_0001>
module attributes {stable_mosaic.version = 11 : i64} {
  func.func @_linear_bias_kernel(%arg0: memref<16x32xf32, #tpu.memory_space<vmem>>, %arg1: memref<32x32xf32, #tpu.memory_space<vmem>>, %arg2: memref<1x32xf32, #tpu.memory_space<vmem>>, %arg3: memref<16x32xf32, #tpu.memory_space<vmem>>) attributes {dimension_semantics = [], scalar_prefetch = 0 : i64, scratch_operands = 0 : i64, tpu.core_type = #tpu.core_type<tc>} {
    %c0 = arith.constant 0 : index
    %c0_0 = arith.constant 0 : index
    %0 = vector.load %arg0[%c0, %c0_0] : memref<16x32xf32, #tpu.memory_space<vmem>>, vector<16x32xf32>
    %c0_1 = arith.constant 0 : index
    %c0_2 = arith.constant 0 : index
    %1 = vector.load %arg1[%c0_1, %c0_2] : memref<32x32xf32, #tpu.memory_space<vmem>>, vector<32x32xf32>
    %cst = arith.constant dense<0.000000e+00> : vector<16x32xf32>
    %2 = tpu.matmul %0, %1, %cst {dimension_numbers = #tpu.dot_dimension_numbers<[1], [0], [0], [1], [0, 0, 1, 1], [], []>} : vector<16x32xf32>, vector<32x32xf32>, vector<16x32xf32> -> vector<16x32xf32>
    %c0_3 = arith.constant 0 : index
    %c0_4 = arith.constant 0 : index
    %3 = vector.load %arg2[%c0_3, %c0_4] : memref<1x32xf32, #tpu.memory_space<vmem>>, vector<1x32xf32>
    %4 = vector.broadcast %3 : vector<1x32xf32> to vector<16x32xf32>
    %5 = arith.addf %2, %4 : vector<16x32xf32>
    %c0_5 = arith.constant 0 : index
    %c0_6 = arith.constant 0 : index
    %6 = vector.load %arg3[%c0_5, %c0_6] : memref<16x32xf32, #tpu.memory_space<vmem>>, vector<16x32xf32>
    tpu.vector_store %arg3[%c0_5, %c0_6], %5 {strides = array<i32>} : memref<16x32xf32, #tpu.memory_space<vmem>>, vector<16x32xf32>,
    return
  }
}

</mosaic_0001>

<llo_original>
// kernel: tpu_custom_call.1
$region0: #{tpu_custom_call.1}
  #allocation0 [shape = 'u32[]', space=smem, size = 0x4, offset = 0x4, fixed_abs, tag = 'smem constant byte address 0x4 - core index']
  #allocation1 [shape = 'u32[144,128]{1,0:T(1,128)}', space=vmem, size = 0x12000, scoped, tag = 'internal scratch']
  %s0 = inlined_call_operand.hbm [shape: f32[16,32], index: 0, kind: input, shape index: {}]
  %s1 = inlined_call_operand.hbm [shape: f32[32,32], index: 1, kind: input, shape index: {}]
  %s2 = inlined_call_operand.vmem [shape: f32[1,32], index: 2, kind: input, shape index: {}]
  %s3 = inlined_call_operand.hbm [shape: f32[16,32], index: 3, kind: output, shape index: {}]
  %s4 = sld [smem:[#allocation0]]
  $region30: #{tpu_custom_call.1} parent=0
    _
  %s6 = ssub.s32 1, %s4
  %s7 = scalar_select 0, %s6, %s4
  $region1: #{tpu_custom_call.1} parent=0
    #allocation2 [shape = 'u8[8192]{0}', space=vmem, size = 0x2000, scoped, tag = 'input window, operand 0, single buffered']
    #allocation3 [shape = 's32[1]{0}', space=sflag, size = 0x4, scoped, tag = 'scoped memory for tpu_custom_call.1']
    #allocation4 [shape = 's32[1]{0}', space=sflag, size = 0x4, scoped, tag = 'scoped memory for tpu_custom_call.1']
    #allocation5 [shape = 'u8[16384]{0}', space=vmem, size = 0x4000, scoped, tag = 'input window, operand 1, single buffered']
    #allocation6 [shape = 's32[1]{0}', space=sflag, size = 0x4, scoped, tag = 'scoped memory for tpu_custom_call.1']
    #allocation7 [shape = 'u8[8192]{0}', space=vmem, size = 0x2000, scoped, tag = 'output window, operand 0, single buffered']
    %8 = vsyncpa [#allocation3], 0
    %9 = vsyncpa [#allocation6], 0
    %10 = vsyncpa [#allocation4], 0
    // Predicated region
    $region2: #{tpu_custom_call.1} parent=1 // pred_check
      _
    $region3: #{tpu_custom_call.1} parent=1 // pred_check_branch
      %12 = sbr.rel (0) target = $region5
    $region4: #{tpu_custom_call.1} parent=1 // pred_region
      %s14 = ssub.s32 256, 256
      %15 = vsyncadd [#allocation3], %s14
      %s16 = sshll.u32 [#allocation2], 4
      %s17 = int_to_ptr.vmem [resolvable:$true] %s16
      %22 = dma.hbm_to_vmem [thread:$0]  %s0, 256, %s17, [#allocation3], 128, 128, 8
    $region5: #{tpu_custom_call.1} parent=1 // pred_fallthru
      _
    // Predicated region
    $region6: #{tpu_custom_call.1} parent=1 // pred_check
      _
    $region7: #{tpu_custom_call.1} parent=1 // pred_check_branch
      %24 = sbr.rel (0) target = $region9
    $region8: #{tpu_custom_call.1} parent=1 // pred_region
      %s26 = ssub.s32 512, 512
      %27 = vsyncadd [#allocation6], %s26
      %s28 = sshll.u32 [#allocation5], 4
      %s29 = int_to_ptr.vmem [resolvable:$true] %s28
      %34 = dma.hbm_to_vmem [thread:$0]  %s1, 512, %s29, [#allocation6], 128, 128, 8
    $region9: #{tpu_custom_call.1} parent=1 // pred_fallthru
      _
    // Predicated region
    $region10: #{tpu_custom_call.1} parent=1 // pred_check
      _
    $region11: #{tpu_custom_call.1} parent=1 // pred_check_branch
      %36 = sbr.rel (0) target = $region13
    $region12: #{tpu_custom_call.1} parent=1 // pred_region
      _
    $region13: #{tpu_custom_call.1} parent=1 // pred_fallthru
      _
    // Predicated region
    $region14: #{tpu_custom_call.1} parent=1 // pred_check
      _
    $region15: #{tpu_custom_call.1} parent=1 // pred_check_branch
      %38 = sbr.rel (0) target = $region17
    $region16: #{tpu_custom_call.1} parent=1 // pred_region
      %39 = dma.done [#allocation3], 256
    $region17: #{tpu_custom_call.1} parent=1 // pred_fallthru
      _
    // Predicated region
    $region18: #{tpu_custom_call.1} parent=1 // pred_check
      _
    $region19: #{tpu_custom_call.1} parent=1 // pred_check_branch
      %41 = sbr.rel (0) target = $region21
    $region20: #{tpu_custom_call.1} parent=1 // pred_region
      %42 = dma.done [#allocation6], 512
    $region21: #{tpu_custom_call.1} parent=1 // pred_fallthru
      _
    %v43 = vld [vmem:[#allocation2] sm:$0xff]
    %v44 = vld [vmem:[#allocation2 + $0x8] sm:$0xff]
    %v45 = vld [vmem:[#allocation5] sm:$0xff]
    %v46 = vld [vmem:[#allocation5 + $0x8] sm:$0xff]
    %v47 = vld [vmem:[#allocation5 + $0x10] sm:$0xff]
    %v48 = vld [vmem:[#allocation5 + $0x18] sm:$0xff]
    %v49 = vld [vmem:[%s2] sm:$0x1]
    %v51 = vlaneseq
    %v52 = vshrl.u32 %v51, 7
    %v53 = vsub.s32 0, %v52
    %v54 = vrot.slane %v49, %v53
    %vm56 = vcmask 261120
    %v58 = vsel %vm56, %v43, 0
    %v61 = vsel %vm56, %v44, 0
    %63 = vmatprep.subr.mxu0 0.0
    %64 = vmatpush1.msra.mxu0 0.0
    %65 = vmatprep.subr.mxu0 0.0
    %66 = vmatpush1.msra.mxu0 0.0
    %67 = vmatprep.subr.mxu0 0.0
    %68 = vmatpush1.msra.mxu0 0.0
    %69 = vmatprep.subr.mxu0 0.0
    %70 = vmatpush1.msra.mxu0 0.0
    %71 = vmatprep.subr.mxu0 0.0
    %72 = vmatpush1.msra.mxu0 0.0
    %73 = vmatprep.subr.mxu0 0.0
    %74 = vmatpush1.msra.mxu0 0.0
    %75 = vmatprep.subr.mxu0 0.0
    %76 = vmatpush1.msra.mxu0 0.0
    %77 = vmatprep.subr.mxu0 0.0
    %78 = vmatpush1.msra.mxu0 0.0
    %79 = vmatprep.subr.mxu0 0.0
    %80 = vmatpush1.msra.mxu0 0.0
    %81 = vmatprep.subr.mxu0 0.0
    %82 = vmatpush1.msra.mxu0 0.0
    %83 = vmatprep.subr.mxu0 0.0
    %84 = vmatpush1.msra.mxu0 0.0
    %85 = vmatprep.subr.mxu0 0.0
    %86 = vmatpush1.msra.mxu0 0.0
    %87 = vmatprep.subr.mxu0 0.0
    %88 = vmatpush1.msra.mxu0 %v48
    %89 = vmatprep.subr.mxu0 0.0
    %90 = vmatpush1.msra.mxu0 %v47
    %91 = vmatprep.subr.mxu0 0.0
    %92 = vmatpush1.msra.mxu0 %v46
    %93 = vmatprep.subr.mxu0 0.0
    %94 = vmatpush1.msra.mxu0 %v45
    %95 = vmatprep.subr.mxu0 0.0
    %96 = vmatpush2.msra.mxu0 0.0
    %97 = vmatprep.subr.mxu0 0.0
    %98 = vmatpush2.msra.mxu0 0.0
    %99 = vmatprep.subr.mxu0 0.0
    %100 = vmatpush2.msra.mxu0 0.0
    %101 = vmatprep.subr.mxu0 0.0
    %102 = vmatpush2.msra.mxu0 0.0
    %103 = vmatprep.subr.mxu0 0.0
    %104 = vmatpush2.msra.mxu0 0.0
    %105 = vmatprep.subr.mxu0 0.0
    %106 = vmatpush2.msra.mxu0 0.0
    %107 = vmatprep.subr.mxu0 0.0
    %108 = vmatpush2.msra.mxu0 0.0
    %109 = vmatprep.subr.mxu0 0.0
    %110 = vmatpush2.msra.mxu0 0.0
    %111 = vmatprep.subr.mxu0 0.0
    %112 = vmatpush2.msra.mxu0 0.0
    %113 = vmatprep.subr.mxu0 0.0
    %114 = vmatpush2.msra.mxu0 0.0
    %115 = vmatprep.subr.mxu0 0.0
    %116 = vmatpush2.msra.mxu0 0.0
    %117 = vmatprep.subr.mxu0 0.0
    %118 = vmatpush2.msra.mxu0 0.0
    %119 = vmatprep.subr.mxu0 0.0
    %120 = vmatpush2.msra.mxu0 0.0
    %121 = vmatprep.subr.mxu0 0.0
    %122 = vmatpush2.msra.mxu0 0.0
    %123 = vmatprep.subr.mxu0 0.0
    %124 = vmatpush2.msra.mxu0 0.0
    %125 = vmatprep.subr.mxu0 0.0
    %126 = vmatpush2.msra.mxu0 0.0
    %127 = vmatprep.mubr.f32.mxu0 0.0
    %128 = vmatmul.mubr.f32.gmra.mxu0 %v58
    %v129 = vpop.f32.mrf.mxu0
    %v130 = vadd.f32 %v54, %v129
    %v131 = vpop.f32.mrf.mxu0
    %132 = vmatprep.mubr.f32.mxu0 0.0
    %133 = vmatmul.mubr.f32.gmra.mxu0 %v61
    %v134 = vpop.f32.mrf.mxu0
    %v135 = vadd.f32 %v54, %v134
    %v136 = vpop.f32.mrf.mxu0
    %137 = vdwg.mxu0
    %138 = vst.msk [vmem:[#allocation7] sm:$0xff] %vm56, %v130
    %139 = vst.msk [vmem:[#allocation7 + $0x8] sm:$0xff] %vm56, %v135
    // Predicated region
    $region22: #{tpu_custom_call.1} parent=1 // pred_check
      _
    $region23: #{tpu_custom_call.1} parent=1 // pred_check_branch
      %141 = sbr.rel (0) target = $region25
    $region24: #{tpu_custom_call.1} parent=1 // pred_region
      %s143 = ssub.s32 256, 256
      %144 = vsyncadd [#allocation4], %s143
      %s145 = sshll.u32 [#allocation7], 4
      %s146 = int_to_ptr.vmem [resolvable:$true] %s145
      %151 = dma.vmem_to_hbm [thread:$0]  %s146, 256, %s3, [#allocation4], 128, 128, 8
    $region25: #{tpu_custom_call.1} parent=1 // pred_fallthru
      _
    // Predicated region
    $region26: #{tpu_custom_call.1} parent=1 // pred_check
      _
    $region27: #{tpu_custom_call.1} parent=1 // pred_check_branch
      %153 = sbr.rel (0) target = $region29
    $region28: #{tpu_custom_call.1} parent=1 // pred_region
      %154 = dma.done [#allocation4], 256
    $region29: #{tpu_custom_call.1} parent=1 // pred_fallthru
      _
    %155 = vsyncpa [#allocation3], 1
    %156 = vsyncpa [#allocation6], 1
    %157 = vsyncpa [#allocation4], 1

</llo_original>
